<compile_context>
chip_gen: v6e
topology: v6e:2x2x1
jax: 0.10.0
libtpu: 0.0.40
codegen_flags: <defaults>
</compile_context>

<pallas_src>
import functools

import jax
import jax.numpy as jnp
import numpy as np
from jax.experimental import pallas as pl
from jax.experimental.pallas import tpu as pltpu


def _freq_pe_kernel(f_ref, x_ref, o_ref, *, num_freqs, input_dim, include_input):
    """Lane-dense elementwise body.

    f_ref: (F, 1)        frequencies (float32).
    x_ref: (D, TR)       transposed input tile (rows on the lane axis).
    o_ref: (out_dim, TR) transposed output tile.
    """
    F = num_freqs
    D = input_dim

    x = x_ref[...].astype(jnp.float32)                                  # (D, TR)
    tr = x.shape[-1]
    # Hoist the lane broadcast out of the loop (JAX does not CSE broadcast_in_dim).
    fb = jnp.broadcast_to(f_ref[...].astype(jnp.float32), (F, tr))      # (F, TR)

    base = D if include_input else 0
    if include_input:
        o_ref[0:D, :] = x.astype(o_ref.dtype)                           # passthrough slab

    sin_off = base
    cos_off = base + D * F
    # TODO(synk): the per-d (F, TR) slab stores start at sublane offsets that are
    # not multiples of 8, so they lower to masked vst's; consolidating them into
    # one 18-row sin store + one 18-row cos store needs a sublane concat/repeat
    # whose relayout cost must be benchmarked against the masked stores (which are
    # hidden under HBM on v5e/v6e and only marginal on v7x).
    for d in range(D):                                                   # static unroll, D ~ 3
        prod = fb * x[d:d + 1, :]                                        # (F, TR), lane-dense
        o_ref[sin_off + d * F: sin_off + (d + 1) * F, :] = (
            jnp.sin(prod).astype(o_ref.dtype))
        o_ref[cos_off + d * F: cos_off + (d + 1) * F, :] = (
            jnp.cos(prod).astype(o_ref.dtype))


def _pick_tile(rows: int, tile_max: int, min_steps: int = 4, min_tile: int = 2048) -> int:
    """Lane-axis tile size.

    Big tiles amortize the ~0.35 us per-grid-step overhead; aim for >= min_steps
    steps when rows allow so (a) both of v7x's TensorCores get work and (b) each
    core still pipelines prefetch/writeback against compute.  Never shrink a tile
    below min_tile just to manufacture steps (that only hurts single-core v5e/v6e).
    """
    if rows <= min_tile:
        return rows                                    # single block, block == full dim
    tile = max(min_tile, pl.cdiv(rows, min_steps))
    tile = ((tile + 127) // 128) * 128                 # lane tiles must be multiples of 128
    tile = min(tile, max(128, (tile_max // 128) * 128))
    if tile >= rows:
        return rows
    return tile


def frequency_positional_embedding(
    x,
    num_freqs: int = 6,
    logspace: bool = True,
    include_input: bool = True,
    include_pi: bool = True,
    tile_max: int = 32 * 1024,
    return_transposed: bool = False,
):
    """Pallas implementation of FrequencyPositionalEmbedding.forward.

    If return_transposed=True, returns the (out_dim, *leading) layout directly
    (no output transpose) for layout-aware consumers; otherwise matches the
    PyTorch module exactly: shape (*leading, out_dim).
    """
    if num_freqs == 0:
        return x

    # "Buffer" init, mirroring the PyTorch __init__ (kept as a runtime input so the
    # kernel does not capture an array constant and does not recompile per value).
    if logspace:
        freqs = 2.0 ** jnp.arange(num_freqs, dtype=jnp.float32)
    else:
        freqs = jnp.linspace(1.0, 2.0 ** (num_freqs - 1), num_freqs, dtype=jnp.float32)
    if include_pi:
        freqs = freqs * jnp.pi
    freqs = freqs.reshape(num_freqs, 1).astype(jnp.float32)             # (F, 1)

    orig_shape = x.shape
    D = orig_shape[-1]
    F = num_freqs
    out_dim = D * (2 * F + (1 if include_input else 0))
    itemsize = jnp.dtype(x.dtype).itemsize

    x2 = x.reshape(-1, D)
    rows = x2.shape[0]

    # Size the tile so the double-buffered in+out blocks (plus broadcast/product
    # temporaries) stay well under v7x's 64 MiB VMEM; v5e/v6e (128 MiB) are safe too.
    vmem_budget = 40 * 1024 * 1024
    bytes_per_lane = 2 * (D + out_dim) * itemsize + 3 * F * 4
    tile_cap = max(128, vmem_budget // bytes_per_lane)
    tile = _pick_tile(rows, min(tile_max, tile_cap))
    grid = (pl.cdiv(rows, tile),)                    # ragged last block OK, no jnp.pad

    vmem_need = bytes_per_lane * tile + (1 << 20)
    vmem_limit = int(min(48 * 1024 * 1024, max(32 * 1024 * 1024, vmem_need)))

    # TODO(synk): the (rows, D) -> (D, rows) input transpose (~24 B/row) and the
    # default (out_dim, rows) -> (rows, out_dim) output transpose are XLA copies;
    # layout-aware consumers should pass return_transposed=True to drop the output
    # transpose (the dominant extra HBM traffic).  An in-kernel XLU relayout is the
    # remaining alternative but needs benchmarking vs the XLA transpose on v6e/v7x.
    xt = x2.T                                                            # (D, rows)

    kernel = functools.partial(
        _freq_pe_kernel, num_freqs=F, input_dim=D, include_input=include_input)

    cost = pl.CostEstimate(
        flops=int(rows * D * F),                     # the x*f multiplies
        transcendentals=int(2 * rows * D * F),       # sin + cos
        bytes_accessed=int(rows * (D + out_dim) * itemsize + F * 4),
    )

    out_t = pl.pallas_call(
        kernel,
        out_shape=jax.ShapeDtypeStruct((out_dim, rows), x.dtype),
        grid=grid,
        in_specs=[
            pl.BlockSpec((F, 1), lambda i: (0, 0)),                      # tiny freq block
            pl.BlockSpec((D, tile), lambda i: (0, i)),                   # input tile
        ],
        out_specs=pl.BlockSpec((out_dim, tile), lambda i: (0, i)),
        compiler_params=pltpu.CompilerParams(
            dimension_semantics=("parallel",),
            vmem_limit_bytes=vmem_limit,
        ),
        cost_estimate=cost,
    )(freqs, xt)

    if return_transposed:
        # (out_dim, rows) -> (out_dim, *leading): trailing-axis split, no copy.
        return out_t.reshape(out_dim, *orig_shape[:-1])
    return out_t.T.reshape(*orig_shape[:-1], out_dim)


def _reference(x, num_freqs=6, logspace=True, include_input=True, include_pi=True):
    """Plain-JAX reference reproducing the PyTorch forward exactly."""
    if num_freqs == 0:
        return x
    if logspace:
        freqs = 2.0 ** jnp.arange(num_freqs, dtype=jnp.float32)
    else:
        freqs = jnp.linspace(1.0, 2.0 ** (num_freqs - 1), num_freqs, dtype=jnp.float32)
    if include_pi:
        freqs = freqs * jnp.pi
    embed = (x[..., None] * freqs).reshape(*x.shape[:-1], -1)
    if include_input:
        return jnp.concatenate((x, jnp.sin(embed), jnp.cos(embed)), axis=-1)
    return jnp.concatenate((jnp.sin(embed), jnp.cos(embed)), axis=-1)


if __name__ == "__main__":
    key = jax.random.PRNGKey(0)
    k1, k2, k3 = jax.random.split(key, 3)

    # 1) Small single-block case: [2, 8, 3] -> [2, 8, 39].
    x_small = jax.random.normal(k1, (2, 8, 3), dtype=jnp.float32)
    out_small = jax.block_until_ready(frequency_positional_embedding(x_small))
    ref_small = _reference(x_small)
    assert out_small.shape == ref_small.shape == (2, 8, 39)
    np.testing.assert_allclose(np.asarray(out_small), np.asarray(ref_small),
                               rtol=1e-5, atol=3e-5)

    # 2) Multi-block grid with a ragged last block: rows=4800 -> tile=2048, 3 steps.
    x_med = jax.random.normal(k2, (4, 1200, 3), dtype=jnp.float32)
    out_med = jax.block_until_ready(frequency_positional_embedding(x_med))
    ref_med = _reference(x_med)
    assert out_med.shape == ref_med.shape == (4, 1200, 39)
    np.testing.assert_allclose(np.asarray(out_med), np.asarray(ref_med),
                               rtol=1e-5, atol=3e-5)

    # 3) include_input=False / logspace=False variant: [2, 8, 3] -> [2, 8, 36].
    x_alt = jax.random.normal(k3, (2, 8, 3), dtype=jnp.float32)
    out_alt = jax.block_until_ready(
        frequency_positional_embedding(x_alt, include_input=False, logspace=False))
    ref_alt = _reference(x_alt, include_input=False, logspace=False)
    assert out_alt.shape == ref_alt.shape == (2, 8, 36)
    np.testing.assert_allclose(np.asarray(out_alt), np.asarray(ref_alt),
                               rtol=1e-5, atol=3e-5)

    # 4) Transposed fast path returns the same data without the output transpose.
    out_tr = jax.block_until_ready(
        frequency_positional_embedding(x_small, return_transposed=True))
    assert out_tr.shape == (39, 2, 8)
    np.testing.assert_allclose(np.asarray(jnp.moveaxis(out_tr, 0, -1)),
                               np.asarray(ref_small), rtol=1e-5, atol=3e-5)

    print("KERNEL_OK")
</pallas_src>

<mosaic_0001>
module attributes {stable_mosaic.version = 11 : i64} {
  func.func @_freq_pe_kernel(%arg0: i32, %arg1: memref<6x1xf32, #tpu.memory_space<vmem>>, %arg2: memref<3x16xf32, #tpu.memory_space<vmem>>, %arg3: memref<39x16xf32, #tpu.memory_space<vmem>>) attributes {dimension_semantics = [#tpu.dimension_semantics<parallel>], iteration_bounds = array<i64: 1>, scalar_prefetch = 0 : i64, scratch_operands = 0 : i64, tpu.core_type = #tpu.core_type<tc>, window_params = [{pipeline_mode = #tpu.pipeline_mode<synchronous>, transform_indices = @transform_0, window_bounds = array<i64: 6, 1>}, {transform_indices = @transform_1, window_bounds = array<i64: 3, 16>}, {transform_indices = @transform_2, window_bounds = array<i64: 39, 16>}]} {
    %c0 = arith.constant 0 : index
    %c0_0 = arith.constant 0 : index
    %0 = vector.load %arg2[%c0, %c0_0] : memref<3x16xf32, #tpu.memory_space<vmem>>, vector<3x16xf32>
    %c0_1 = arith.constant 0 : index
    %c0_2 = arith.constant 0 : index
    %1 = vector.load %arg1[%c0_1, %c0_2] : memref<6x1xf32, #tpu.memory_space<vmem>>, vector<6x1xf32>
    %2 = vector.shape_cast %1 : vector<6x1xf32> to vector<6x1xf32>
    %3 = vector.broadcast %2 : vector<6x1xf32> to vector<6x16xf32>
    %c0_3 = arith.constant 0 : index
    %c0_4 = arith.constant 0 : index
    %4 = vector.load %arg3[%c0_3, %c0_4] : memref<39x16xf32, #tpu.memory_space<vmem>>, vector<3x16xf32>
    tpu.vector_store %arg3[%c0_3, %c0_4], %0 {strides = array<i32>} : memref<39x16xf32, #tpu.memory_space<vmem>>, vector<3x16xf32>,
    %5 = vector.extract_strided_slice %0 {offsets = [0, 0], sizes = [1, 16], strides = [1, 1]} : vector<3x16xf32> to vector<1x16xf32>
    %6 = vector.broadcast %5 : vector<1x16xf32> to vector<6x16xf32>
    %7 = arith.mulf %3, %6 : vector<6x16xf32>
    %8 = math.sin %7 : vector<6x16xf32>
    %c3 = arith.constant 3 : index
    %c0_5 = arith.constant 0 : index
    %9 = vector.load %arg3[%c3, %c0_5] : memref<39x16xf32, #tpu.memory_space<vmem>>, vector<6x16xf32>
    tpu.vector_store %arg3[%c3, %c0_5], %8 {strides = array<i32>} : memref<39x16xf32, #tpu.memory_space<vmem>>, vector<6x16xf32>,
    %10 = math.cos %7 : vector<6x16xf32>
    %c21 = arith.constant 21 : index
    %c0_6 = arith.constant 0 : index
    %11 = vector.load %arg3[%c21, %c0_6] : memref<39x16xf32, #tpu.memory_space<vmem>>, vector<6x16xf32>
    tpu.vector_store %arg3[%c21, %c0_6], %10 {strides = array<i32>} : memref<39x16xf32, #tpu.memory_space<vmem>>, vector<6x16xf32>,
    %12 = vector.extract_strided_slice %0 {offsets = [1, 0], sizes = [1, 16], strides = [1, 1]} : vector<3x16xf32> to vector<1x16xf32>
    %13 = vector.broadcast %12 : vector<1x16xf32> to vector<6x16xf32>
    %14 = arith.mulf %3, %13 : vector<6x16xf32>
    %15 = math.sin %14 : vector<6x16xf32>
    %c9 = arith.constant 9 : index
    %c0_7 = arith.constant 0 : index
    %16 = vector.load %arg3[%c9, %c0_7] : memref<39x16xf32, #tpu.memory_space<vmem>>, vector<6x16xf32>
    tpu.vector_store %arg3[%c9, %c0_7], %15 {strides = array<i32>} : memref<39x16xf32, #tpu.memory_space<vmem>>, vector<6x16xf32>,
    %17 = math.cos %14 : vector<6x16xf32>
    %c27 = arith.constant 27 : index
    %c0_8 = arith.constant 0 : index
    %18 = vector.load %arg3[%c27, %c0_8] : memref<39x16xf32, #tpu.memory_space<vmem>>, vector<6x16xf32>
    tpu.vector_store %arg3[%c27, %c0_8], %17 {strides = array<i32>} : memref<39x16xf32, #tpu.memory_space<vmem>>, vector<6x16xf32>,
    %19 = vector.extract_strided_slice %0 {offsets = [2, 0], sizes = [1, 16], strides = [1, 1]} : vector<3x16xf32> to vector<1x16xf32>
    %20 = vector.broadcast %19 : vector<1x16xf32> to vector<6x16xf32>
    %21 = arith.mulf %3, %20 : vector<6x16xf32>
    %22 = math.sin %21 : vector<6x16xf32>
    %c15 = arith.constant 15 : index
    %c0_9 = arith.constant 0 : index
    %23 = vector.load %arg3[%c15, %c0_9] : memref<39x16xf32, #tpu.memory_space<vmem>>, vector<6x16xf32>
    tpu.vector_store %arg3[%c15, %c0_9], %22 {strides = array<i32>} : memref<39x16xf32, #tpu.memory_space<vmem>>, vector<6x16xf32>,
    %24 = math.cos %21 : vector<6x16xf32>
    %c33 = arith.constant 33 : index
    %c0_10 = arith.constant 0 : index
    %25 = vector.load %arg3[%c33, %c0_10] : memref<39x16xf32, #tpu.memory_space<vmem>>, vector<6x16xf32>
    tpu.vector_store %arg3[%c33, %c0_10], %24 {strides = array<i32>} : memref<39x16xf32, #tpu.memory_space<vmem>>, vector<6x16xf32>,
    return
  }
  func.func @transform_0(%arg0: i32) -> (i32, i32) {
    %c0_i32 = arith.constant 0 : i32
    %c0_i32_0 = arith.constant 0 : i32
    %c0_i32_1 = arith.constant 0 : i32
    return %c0_i32, %c0_i32_0 : i32, i32
  }
  func.func @transform_1(%arg0: i32) -> (i32, i32) {
    %c0_i32 = arith.constant 0 : i32
    %c0_i32_0 = arith.constant 0 : i32
    return %c0_i32, %arg0 : i32, i32
  }
  func.func @transform_2(%arg0: i32) -> (i32, i32) {
    %c0_i32 = arith.constant 0 : i32
    %c0_i32_0 = arith.constant 0 : i32
    return %c0_i32, %arg0 : i32, i32
  }
}

</mosaic_0001>

<llo_original>
// kernel: tpu_custom_call.1
$region0: #{tpu_custom_call.1}
  #allocation0 [shape = 'u32[]', space=smem, size = 0x4, offset = 0x4, fixed_abs, tag = 'smem constant byte address 0x4 - core index']
  #allocation1 [shape = 'u32[144,128]{1,0:T(1,128)}', space=vmem, size = 0x12000, scoped, tag = 'internal scratch']
  %s0 = inlined_call_operand.vmem [shape: f32[6,1], index: 0, kind: input, shape index: {}]
  %s1 = inlined_call_operand.vmem [shape: f32[3,16], index: 1, kind: input, shape index: {}]
  %s2 = inlined_call_operand.vmem [shape: f32[39,16], index: 2, kind: output, shape index: {}]
  %s3 = sld [smem:[#allocation0]]
  $region18: #{tpu_custom_call.1} parent=0
    _
  %s5 = ssub.s32 1, %s3
  %s6 = scalar_select 0, %s5, %s3
  // Predicated region
  $region2: #{tpu_custom_call.1} parent=0 // pred_check
    _
  $region3: #{tpu_custom_call.1} parent=0 // pred_check_branch
    %8 = sbr.rel (0) target = $region5
  $region4: #{tpu_custom_call.1} parent=0 // pred_region
    _
  $region5: #{tpu_custom_call.1} parent=0 // pred_fallthru
    _
  // Predicated region
  $region6: #{tpu_custom_call.1} parent=0 // pred_check
    _
  $region7: #{tpu_custom_call.1} parent=0 // pred_check_branch
    %10 = sbr.rel (0) target = $region9
  $region8: #{tpu_custom_call.1} parent=0 // pred_region
    _
  $region9: #{tpu_custom_call.1} parent=0 // pred_fallthru
    _
  %v11 = vld [vmem:[%s1] sm:$0x7]
  %v12 = vld [vmem:[%s0] sm:$0x3f]
  %14 = vset.pattern.permute.xlu0 0
  %15 = vperm.xlu0 %14, %v12
  %v16 = vpop.permute.xlu0 %15
  %vm18 = vcmask 124928
  %19 = vst.msk [vmem:[%s2] sm:$0x7] %vm18, %v11
  %v20 = vlaneseq
  %v21 = vshrl.u32 %v20, 7
  %v22 = vsub.s32 0, %v21
  %v23 = vrot.slane %v11, %v22
  %v24 = vmul.f32 %v16, %v23
  %v25 = vand.u32 2147483647, %v24
  %vm26 = vcmp.le.f32.partialorder %v25, 0.7853982
  %vm27 = vcmp.lt.s32.totalorder %v24, 0
  %v28 = vand.u32 %v24, 2139095040
  %v29 = vshrl.u32 %v28, 23
  %v30 = vsub.s32 %v29, 127
  %v31 = vand.u32 2147483647, %v24
  %v32 = vand.u32 %v31, 8388607
  %v33 = vor.u32 %v32, 8388608
  %v34 = vsub.s32 0, %v33
  %v35 = vadd.s32 %v30, 1
  %vm36 = vcmp.gt.s32.totalorder %v35, 0
  %v37 = vsel %vm36, %v35, 0
  %v38 = vshrl.u32 %v37, 5
  %v39 = vand.u32 %v37, 31
  %v40 = vsub.s32 32, %v39
  %v41 = vshrl.u32 683565275, %v40
  %v42 = vshll.u32 683565275, %v39
  %v43 = vshrl.u32 2475754826, %v40
  %v44 = vor.u32 %v42, %v43
  %v45 = vshll.u32 2475754826, %v39
  %v46 = vshrl.u32 2131351028, %v40
  %v47 = vor.u32 %v45, %v46
  %v48 = vshll.u32 2131351028, %v39
  %v49 = vshrl.u32 2102212464, %v40
  %v50 = vor.u32 %v48, %v49
  %v51 = vshll.u32 2102212464, %v39
  %v52 = vshrl.u32 920167782, %v40
  %v53 = vor.u32 %v51, %v52
  %v54 = vshll.u32 920167782, %v39
  %v55 = vshrl.u32 1326507024, %v40
  %v56 = vor.u32 %v54, %v55
  %vm57 = vcmp.lt.s32.totalorder %v38, 1
  %vm58 = vcmp.lt.s32.totalorder %v38, 2
  %vm59 = vcmp.lt.s32.totalorder %v38, 3
  %vm60 = vcmp.lt.s32.totalorder %v38, 4
  %v61 = vsel %vm57, %v41, %v44
  %v62 = vsel %vm60, %v50, 2102212464
  %v63 = vsel %vm59, %v47, %v62
  %v64 = vsel %vm58, %v61, %v63
  %v65 = vsel %vm57, %v44, %v47
  %v66 = vsel %vm60, %v53, 920167782
  %v67 = vsel %vm59, %v50, %v66
  %v68 = vsel %vm58, %v65, %v67
  %v69 = vsel %vm57, %v47, %v50
  %v70 = vsel %vm60, %v56, 1326507024
  %v71 = vsel %vm59, %v53, %v70
  %v72 = vsel %vm58, %v69, %v71
  %v73 = vshll.u32 %v33, 8
  %v74 = vmul.u32.u64.compose %v73, %v72
  %v75 = vextract.low.u32 %v74
  %v76 = vextract.high.u32 %v74
  %v77 = vmul.u32.u64.compose %v73, %v68
  %v78 = vextract.low.u32 %v77
  %v79 = vextract.high.u32 %v77
  %v80 = vmul.u32 %v73, %v64
  %v81 = vadd.s32 %v76, %v78
  %vm82 = vc.u32 %v76, %v78
  %v83 = vadd.s32 %v79, 1
  %v84 = vsel %vm82, %v83, %v79
  %v85 = vadd.s32 %v80, %v84
  %v86 = vadd.s32 %v85, 536870912
  %v87 = vshrl.u32 %v86, 30
  %v88 = vshll.u32 %v87, 30
  %v89 = vsub.s32 %v85, %v88
  %vm90 = vcmp.lt.s32.totalorder %v89, 0
  %v91 = vsub.s32 0, %v89
  %v92 = vsel %vm90, %v91, %v89
  %v93 = vclz %v92
  %v94 = vsub.s32 %v93, 2
  %vm95 = vcmp.gt.s32.totalorder 0, %v94
  %v96 = vsel %vm95, 0, %v94
  %v97 = vsub.s32 32, %v96
  %v98 = vshll.u32 %v89, %v96
  %v99 = vshrl.u32 %v81, %v97
  %v100 = vor.u32 %v98, %v99
  %v101 = vsub.s32 4294967266, %v96
  %v102 = vadd.s32 %v101, 127
  %v103 = vshll.u32 %v102, 23
  %v104 = vor.u32 4788187, %v103
  %v105 = vand.u32 2147483647, %v104
  %v107 = vcvt.s32.f32 %v100
  %v108 = vmul.f32 %v107, %v105
  %v109 = vxor.u32 %v108, 2147483648
  %v110 = vsel %vm27, %v109, %v108
  %v111 = vsub.s32 4, %v87
  %v112 = vsel %vm27, %v111, %v87
  %v113 = vsel %vm26, %v24, %v110
  %v114 = vsel %vm26, 0, %v112
  %v115 = vcosq.f32.pop %v113
  %v116 = vsinq.f32.pop %v113
  %vm117 = vweird.f32 %v24
  %v118 = vadd.s32 %v114, 3
  %v119 = vand.u32 %v118, 3
  %vm120 = vcmp.lt.s32.totalorder %v119, 2
  %vm121 = vcmp.eq.s32.totalorder %v119, 0
  %v122 = vxor.u32 %v116, 2147483648
  %v123 = vsel %vm121, %v115, %v122
  %vm124 = vcmp.eq.s32.totalorder %v119, 2
  %v125 = vxor.u32 %v115, 2147483648
  %v126 = vsel %vm124, %v125, %v116
  %v127 = vsel %vm120, %v123, %v126
  %v128 = vsel %vm117, nan, %v127
  %vm129 = vcmask 128000
  %130 = vst.msk [vmem:[%s2 + $0x3] sm:$0x3f] %vm129, %v128
  %v131 = vand.u32 2147483647, %v24
  %vm132 = vcmp.le.f32.partialorder %v131, 0.7853982
  %vm133 = vcmp.lt.s32.totalorder %v24, 0
  %v134 = vand.u32 %v24, 2139095040
  %v135 = vshrl.u32 %v134, 23
  %v136 = vsub.s32 %v135, 127
  %v137 = vand.u32 2147483647, %v24
  %v138 = vand.u32 %v137, 8388607
  %v139 = vor.u32 %v138, 8388608
  %v140 = vsub.s32 0, %v139
  %v141 = vadd.s32 %v136, 1
  %vm142 = vcmp.gt.s32.totalorder %v141, 0
  %v143 = vsel %vm142, %v141, 0
  %v144 = vshrl.u32 %v143, 5
  %v145 = vand.u32 %v143, 31
  %v146 = vsub.s32 32, %v145
  %v147 = vshrl.u32 683565275, %v146
  %v148 = vshll.u32 683565275, %v145
  %v149 = vshrl.u32 2475754826, %v146
  %v150 = vor.u32 %v148, %v149
  %v151 = vshll.u32 2475754826, %v145
  %v152 = vshrl.u32 2131351028, %v146
  %v153 = vor.u32 %v151, %v152
  %v154 = vshll.u32 2131351028, %v145
  %v155 = vshrl.u32 2102212464, %v146
  %v156 = vor.u32 %v154, %v155
  %v157 = vshll.u32 2102212464, %v145
  %v158 = vshrl.u32 920167782, %v146
  %v159 = vor.u32 %v157, %v158
  %v160 = vshll.u32 920167782, %v145
  %v161 = vshrl.u32 1326507024, %v146
  %v162 = vor.u32 %v160, %v161
  %vm163 = vcmp.lt.s32.totalorder %v144, 1
  %vm164 = vcmp.lt.s32.totalorder %v144, 2
  %vm165 = vcmp.lt.s32.totalorder %v144, 3
  %vm166 = vcmp.lt.s32.totalorder %v144, 4
  %v167 = vsel %vm163, %v147, %v150
  %v168 = vsel %vm166, %v156, 2102212464
  %v169 = vsel %vm165, %v153, %v168
  %v170 = vsel %vm164, %v167, %v169
  %v171 = vsel %vm163, %v150, %v153
  %v172 = vsel %vm166, %v159, 920167782
  %v173 = vsel %vm165, %v156, %v172
  %v174 = vsel %vm164, %v171, %v173
  %v175 = vsel %vm163, %v153, %v156
  %v176 = vsel %vm166, %v162, 1326507024
  %v177 = vsel %vm165, %v159, %v176
  %v178 = vsel %vm164, %v175, %v177
  %v179 = vshll.u32 %v139, 8
  %v180 = vmul.u32.u64.compose %v179, %v178
  %v181 = vextract.low.u32 %v180
  %v182 = vextract.high.u32 %v180
  %v183 = vmul.u32.u64.compose %v179, %v174
  %v184 = vextract.low.u32 %v183
  %v185 = vextract.high.u32 %v183
  %v186 = vmul.u32 %v179, %v170
  %v187 = vadd.s32 %v182, %v184
  %vm188 = vc.u32 %v182, %v184
  %v189 = vadd.s32 %v185, 1
  %v190 = vsel %vm188, %v189, %v185
  %v191 = vadd.s32 %v186, %v190
  %v192 = vadd.s32 %v191, 536870912
  %v193 = vshrl.u32 %v192, 30
  %v194 = vshll.u32 %v193, 30
  %v195 = vsub.s32 %v191, %v194
  %vm196 = vcmp.lt.s32.totalorder %v195, 0
  %v197 = vsub.s32 0, %v195
  %v198 = vsel %vm196, %v197, %v195
  %v199 = vclz %v198
  %v200 = vsub.s32 %v199, 2
  %vm201 = vcmp.gt.s32.totalorder 0, %v200
  %v202 = vsel %vm201, 0, %v200
  %v203 = vsub.s32 32, %v202
  %v204 = vshll.u32 %v195, %v202
  %v205 = vshrl.u32 %v187, %v203
  %v206 = vor.u32 %v204, %v205
  %v207 = vsub.s32 4294967266, %v202
  %v208 = vadd.s32 %v207, 127
  %v209 = vshll.u32 %v208, 23
  %v210 = vor.u32 4788187, %v209
  %v211 = vand.u32 2147483647, %v210
  %v213 = vcvt.s32.f32 %v206
  %v214 = vmul.f32 %v213, %v211
  %v215 = vxor.u32 %v214, 2147483648
  %v216 = vsel %vm133, %v215, %v214
  %v217 = vsub.s32 4, %v193
  %v218 = vsel %vm133, %v217, %v193
  %v219 = vsel %vm132, %v24, %v216
  %v220 = vsel %vm132, 0, %v218
  %v221 = vcosq.f32.pop %v219
  %v222 = vsinq.f32.pop %v219
  %vm223 = vweird.f32 %v24
  %v224 = vand.u32 %v220, 3
  %vm225 = vcmp.lt.s32.totalorder %v224, 2
  %vm226 = vcmp.eq.s32.totalorder %v224, 0
  %v227 = vxor.u32 %v222, 2147483648
  %v228 = vsel %vm226, %v221, %v227
  %vm229 = vcmp.eq.s32.totalorder %v224, 2
  %v230 = vxor.u32 %v221, 2147483648
  %v231 = vsel %vm229, %v230, %v222
  %v232 = vsel %vm225, %v228, %v231
  %v233 = vsel %vm223, nan, %v232
  %234 = vst.msk [vmem:[%s2 + $0x15] sm:$0x3f] %vm129, %v233
  %v235 = vlaneseq
  %v236 = vshrl.u32 %v235, 7
  %v237 = vsub.s32 1, %v236
  %v238 = vrot.slane %v11, %v237
  %v239 = vmul.f32 %v16, %v238
  %v240 = vand.u32 2147483647, %v239
  %vm241 = vcmp.le.f32.partialorder %v240, 0.7853982
  %vm242 = vcmp.lt.s32.totalorder %v239, 0
  %v243 = vand.u32 %v239, 2139095040
  %v244 = vshrl.u32 %v243, 23
  %v245 = vsub.s32 %v244, 127
  %v246 = vand.u32 2147483647, %v239
  %v247 = vand.u32 %v246, 8388607
  %v248 = vor.u32 %v247, 8388608
  %v249 = vsub.s32 0, %v248
  %v250 = vadd.s32 %v245, 1
  %vm251 = vcmp.gt.s32.totalorder %v250, 0
  %v252 = vsel %vm251, %v250, 0
  %v253 = vshrl.u32 %v252, 5
  %v254 = vand.u32 %v252, 31
  %v255 = vsub.s32 32, %v254
  %v256 = vshrl.u32 683565275, %v255
  %v257 = vshll.u32 683565275, %v254
  %v258 = vshrl.u32 2475754826, %v255
  %v259 = vor.u32 %v257, %v258
  %v260 = vshll.u32 2475754826, %v254
  %v261 = vshrl.u32 2131351028, %v255
  %v262 = vor.u32 %v260, %v261
  %v263 = vshll.u32 2131351028, %v254
  %v264 = vshrl.u32 2102212464, %v255
  %v265 = vor.u32 %v263, %v264
  %v266 = vshll.u32 2102212464, %v254
  %v267 = vshrl.u32 920167782, %v255
  %v268 = vor.u32 %v266, %v267
  %v269 = vshll.u32 920167782, %v254
  %v270 = vshrl.u32 1326507024, %v255
  %v271 = vor.u32 %v269, %v270
  %vm272 = vcmp.lt.s32.totalorder %v253, 1
  %vm273 = vcmp.lt.s32.totalorder %v253, 2
  %vm274 = vcmp.lt.s32.totalorder %v253, 3
  %vm275 = vcmp.lt.s32.totalorder %v253, 4
  %v276 = vsel %vm272, %v256, %v259
  %v277 = vsel %vm275, %v265, 2102212464
  %v278 = vsel %vm274, %v262, %v277
  %v279 = vsel %vm273, %v276, %v278
  %v280 = vsel %vm272, %v259, %v262
  %v281 = vsel %vm275, %v268, 920167782
  %v282 = vsel %vm274, %v265, %v281
  %v283 = vsel %vm273, %v280, %v282
  %v284 = vsel %vm272, %v262, %v265
  %v285 = vsel %vm275, %v271, 1326507024
  %v286 = vsel %vm274, %v268, %v285
  %v287 = vsel %vm273, %v284, %v286
  %v288 = vshll.u32 %v248, 8
  %v289 = vmul.u32.u64.compose %v288, %v287
  %v290 = vextract.low.u32 %v289
  %v291 = vextract.high.u32 %v289
  %v292 = vmul.u32.u64.compose %v288, %v283
  %v293 = vextract.low.u32 %v292
  %v294 = vextract.high.u32 %v292
  %v295 = vmul.u32 %v288, %v279
  %v296 = vadd.s32 %v291, %v293
  %vm297 = vc.u32 %v291, %v293
  %v298 = vadd.s32 %v294, 1
  %v299 = vsel %vm297, %v298, %v294
  %v300 = vadd.s32 %v295, %v299
  %v301 = vadd.s32 %v300, 536870912
  %v302 = vshrl.u32 %v301, 30
  %v303 = vshll.u32 %v302, 30
  %v304 = vsub.s32 %v300, %v303
  %vm305 = vcmp.lt.s32.totalorder %v304, 0
  %v306 = vsub.s32 0, %v304
  %v307 = vsel %vm305, %v306, %v304
  %v308 = vclz %v307
  %v309 = vsub.s32 %v308, 2
  %vm310 = vcmp.gt.s32.totalorder 0, %v309
  %v311 = vsel %vm310, 0, %v309
  %v312 = vsub.s32 32, %v311
  %v313 = vshll.u32 %v304, %v311
  %v314 = vshrl.u32 %v296, %v312
  %v315 = vor.u32 %v313, %v314
  %v316 = vsub.s32 4294967266, %v311
  %v317 = vadd.s32 %v316, 127
  %v318 = vshll.u32 %v317, 23
  %v319 = vor.u32 4788187, %v318
  %v320 = vand.u32 2147483647, %v319
  %v322 = vcvt.s32.f32 %v315
  %v323 = vmul.f32 %v322, %v320
  %v324 = vxor.u32 %v323, 2147483648
  %v325 = vsel %vm242, %v324, %v323
  %v326 = vsub.s32 4, %v302
  %v327 = vsel %vm242, %v326, %v302
  %v328 = vsel %vm241, %v239, %v325
  %v329 = vsel %vm241, 0, %v327
  %v330 = vcosq.f32.pop %v328
  %v331 = vsinq.f32.pop %v328
  %vm332 = vweird.f32 %v239
  %v333 = vadd.s32 %v329, 3
  %v334 = vand.u32 %v333, 3
  %vm335 = vcmp.lt.s32.totalorder %v334, 2
  %vm336 = vcmp.eq.s32.totalorder %v334, 0
  %v337 = vxor.u32 %v331, 2147483648
  %v338 = vsel %vm336, %v330, %v337
  %vm339 = vcmp.eq.s32.totalorder %v334, 2
  %v340 = vxor.u32 %v330, 2147483648
  %v341 = vsel %vm339, %v340, %v331
  %v342 = vsel %vm335, %v338, %v341
  %v343 = vsel %vm332, nan, %v342
  %344 = vst.msk [vmem:[%s2 + $0x9] sm:$0x3f] %vm129, %v343
  %v345 = vand.u32 2147483647, %v239
  %vm346 = vcmp.le.f32.partialorder %v345, 0.7853982
  %vm347 = vcmp.lt.s32.totalorder %v239, 0
  %v348 = vand.u32 %v239, 2139095040
  %v349 = vshrl.u32 %v348, 23
  %v350 = vsub.s32 %v349, 127
  %v351 = vand.u32 2147483647, %v239
  %v352 = vand.u32 %v351, 8388607
  %v353 = vor.u32 %v352, 8388608
  %v354 = vsub.s32 0, %v353
  %v355 = vadd.s32 %v350, 1
  %vm356 = vcmp.gt.s32.totalorder %v355, 0
  %v357 = vsel %vm356, %v355, 0
  %v358 = vshrl.u32 %v357, 5
  %v359 = vand.u32 %v357, 31
  %v360 = vsub.s32 32, %v359
  %v361 = vshrl.u32 683565275, %v360
  %v362 = vshll.u32 683565275, %v359
  %v363 = vshrl.u32 2475754826, %v360
  %v364 = vor.u32 %v362, %v363
  %v365 = vshll.u32 2475754826, %v359
  %v366 = vshrl.u32 2131351028, %v360
  %v367 = vor.u32 %v365, %v366
  %v368 = vshll.u32 2131351028, %v359
  %v369 = vshrl.u32 2102212464, %v360
  %v370 = vor.u32 %v368, %v369
  %v371 = vshll.u32 2102212464, %v359
  %v372 = vshrl.u32 920167782, %v360
  %v373 = vor.u32 %v371, %v372
  %v374 = vshll.u32 920167782, %v359
  %v375 = vshrl.u32 1326507024, %v360
  %v376 = vor.u32 %v374, %v375
  %vm377 = vcmp.lt.s32.totalorder %v358, 1
  %vm378 = vcmp.lt.s32.totalorder %v358, 2
  %vm379 = vcmp.lt.s32.totalorder %v358, 3
  %vm380 = vcmp.lt.s32.totalorder %v358, 4
  %v381 = vsel %vm377, %v361, %v364
  %v382 = vsel %vm380, %v370, 2102212464
  %v383 = vsel %vm379, %v367, %v382
  %v384 = vsel %vm378, %v381, %v383
  %v385 = vsel %vm377, %v364, %v367
  %v386 = vsel %vm380, %v373, 920167782
  %v387 = vsel %vm379, %v370, %v386
  %v388 = vsel %vm378, %v385, %v387
  %v389 = vsel %vm377, %v367, %v370
  %v390 = vsel %vm380, %v376, 1326507024
  %v391 = vsel %vm379, %v373, %v390
  %v392 = vsel %vm378, %v389, %v391
  %v393 = vshll.u32 %v353, 8
  %v394 = vmul.u32.u64.compose %v393, %v392
  %v395 = vextract.low.u32 %v394
  %v396 = vextract.high.u32 %v394
  %v397 = vmul.u32.u64.compose %v393, %v388
  %v398 = vextract.low.u32 %v397
  %v399 = vextract.high.u32 %v397
  %v400 = vmul.u32 %v393, %v384
  %v401 = vadd.s32 %v396, %v398
  %vm402 = vc.u32 %v396, %v398
  %v403 = vadd.s32 %v399, 1
  %v404 = vsel %vm402, %v403, %v399
  %v405 = vadd.s32 %v400, %v404
  %v406 = vadd.s32 %v405, 536870912
  %v407 = vshrl.u32 %v406, 30
  %v408 = vshll.u32 %v407, 30
  %v409 = vsub.s32 %v405, %v408
  %vm410 = vcmp.lt.s32.totalorder %v409, 0
  %v411 = vsub.s32 0, %v409
  %v412 = vsel %vm410, %v411, %v409
  %v413 = vclz %v412
  %v414 = vsub.s32 %v413, 2
  %vm415 = vcmp.gt.s32.totalorder 0, %v414
  %v416 = vsel %vm415, 0, %v414
  %v417 = vsub.s32 32, %v416
  %v418 = vshll.u32 %v409, %v416
  %v419 = vshrl.u32 %v401, %v417
  %v420 = vor.u32 %v418, %v419
  %v421 = vsub.s32 4294967266, %v416
  %v422 = vadd.s32 %v421, 127
  %v423 = vshll.u32 %v422, 23
  %v424 = vor.u32 4788187, %v423
  %v425 = vand.u32 2147483647, %v424
  %v427 = vcvt.s32.f32 %v420
  %v428 = vmul.f32 %v427, %v425
  %v429 = vxor.u32 %v428, 2147483648
  %v430 = vsel %vm347, %v429, %v428
  %v431 = vsub.s32 4, %v407
  %v432 = vsel %vm347, %v431, %v407
  %v433 = vsel %vm346, %v239, %v430
  %v434 = vsel %vm346, 0, %v432
  %v435 = vcosq.f32.pop %v433
  %v436 = vsinq.f32.pop %v433
  %vm437 = vweird.f32 %v239
  %v438 = vand.u32 %v434, 3
  %vm439 = vcmp.lt.s32.totalorder %v438, 2
  %vm440 = vcmp.eq.s32.totalorder %v438, 0
  %v441 = vxor.u32 %v436, 2147483648
  %v442 = vsel %vm440, %v435, %v441
  %vm443 = vcmp.eq.s32.totalorder %v438, 2
  %v444 = vxor.u32 %v435, 2147483648
  %v445 = vsel %vm443, %v444, %v436
  %v446 = vsel %vm439, %v442, %v445
  %v447 = vsel %vm437, nan, %v446
  %448 = vst.msk [vmem:[%s2 + $0x1b] sm:$0x3f] %vm129, %v447
  %v449 = vlaneseq
  %v450 = vshrl.u32 %v449, 7
  %v451 = vsub.s32 2, %v450
  %v452 = vrot.slane %v11, %v451
  %v453 = vmul.f32 %v16, %v452
  %v454 = vand.u32 2147483647, %v453
  %vm455 = vcmp.le.f32.partialorder %v454, 0.7853982
  %vm456 = vcmp.lt.s32.totalorder %v453, 0
  %v457 = vand.u32 %v453, 2139095040
  %v458 = vshrl.u32 %v457, 23
  %v459 = vsub.s32 %v458, 127
  %v460 = vand.u32 2147483647, %v453
  %v461 = vand.u32 %v460, 8388607
  %v462 = vor.u32 %v461, 8388608
  %v463 = vsub.s32 0, %v462
  %v464 = vadd.s32 %v459, 1
  %vm465 = vcmp.gt.s32.totalorder %v464, 0
  %v466 = vsel %vm465, %v464, 0
  %v467 = vshrl.u32 %v466, 5
  %v468 = vand.u32 %v466, 31
  %v469 = vsub.s32 32, %v468
  %v470 = vshrl.u32 683565275, %v469
  %v471 = vshll.u32 683565275, %v468
  %v472 = vshrl.u32 2475754826, %v469
  %v473 = vor.u32 %v471, %v472
  %v474 = vshll.u32 2475754826, %v468
  %v475 = vshrl.u32 2131351028, %v469
  %v476 = vor.u32 %v474, %v475
  %v477 = vshll.u32 2131351028, %v468
  %v478 = vshrl.u32 2102212464, %v469
  %v479 = vor.u32 %v477, %v478
  %v480 = vshll.u32 2102212464, %v468
  %v481 = vshrl.u32 920167782, %v469
  %v482 = vor.u32 %v480, %v481
  %v483 = vshll.u32 920167782, %v468
  %v484 = vshrl.u32 1326507024, %v469
  %v485 = vor.u32 %v483, %v484
  %vm486 = vcmp.lt.s32.totalorder %v467, 1
  %vm487 = vcmp.lt.s32.totalorder %v467, 2
  %vm488 = vcmp.lt.s32.totalorder %v467, 3
  %vm489 = vcmp.lt.s32.totalorder %v467, 4
  %v490 = vsel %vm486, %v470, %v473
  %v491 = vsel %vm489, %v479, 2102212464
  %v492 = vsel %vm488, %v476, %v491
  %v493 = vsel %vm487, %v490, %v492
  %v494 = vsel %vm486, %v473, %v476
  %v495 = vsel %vm489, %v482, 920167782
  %v496 = vsel %vm488, %v479, %v495
  %v497 = vsel %vm487, %v494, %v496
  %v498 = vsel %vm486, %v476, %v479
  %v499 = vsel %vm489, %v485, 1326507024
  %v500 = vsel %vm488, %v482, %v499
  %v501 = vsel %vm487, %v498, %v500
  %v502 = vshll.u32 %v462, 8
  %v503 = vmul.u32.u64.compose %v502, %v501
  %v504 = vextract.low.u32 %v503
  %v505 = vextract.high.u32 %v503
  %v506 = vmul.u32.u64.compose %v502, %v497
  %v507 = vextract.low.u32 %v506
  %v508 = vextract.high.u32 %v506
  %v509 = vmul.u32 %v502, %v493
  %v510 = vadd.s32 %v505, %v507
  %vm511 = vc.u32 %v505, %v507
  %v512 = vadd.s32 %v508, 1
  %v513 = vsel %vm511, %v512, %v508
  %v514 = vadd.s32 %v509, %v513
  %v515 = vadd.s32 %v514, 536870912
  %v516 = vshrl.u32 %v515, 30
  %v517 = vshll.u32 %v516, 30
  %v518 = vsub.s32 %v514, %v517
  %vm519 = vcmp.lt.s32.totalorder %v518, 0
  %v520 = vsub.s32 0, %v518
  %v521 = vsel %vm519, %v520, %v518
  %v522 = vclz %v521
  %v523 = vsub.s32 %v522, 2
  %vm524 = vcmp.gt.s32.totalorder 0, %v523
  %v525 = vsel %vm524, 0, %v523
  %v526 = vsub.s32 32, %v525
  %v527 = vshll.u32 %v518, %v525
  %v528 = vshrl.u32 %v510, %v526
  %v529 = vor.u32 %v527, %v528
  %v530 = vsub.s32 4294967266, %v525
  %v531 = vadd.s32 %v530, 127
  %v532 = vshll.u32 %v531, 23
  %v533 = vor.u32 4788187, %v532
  %v534 = vand.u32 2147483647, %v533
  %v536 = vcvt.s32.f32 %v529
  %v537 = vmul.f32 %v536, %v534
  %v538 = vxor.u32 %v537, 2147483648
  %v539 = vsel %vm456, %v538, %v537
  %v540 = vsub.s32 4, %v516
  %v541 = vsel %vm456, %v540, %v516
  %v542 = vsel %vm455, %v453, %v539
  %v543 = vsel %vm455, 0, %v541
  %v544 = vcosq.f32.pop %v542
  %v545 = vsinq.f32.pop %v542
  %vm546 = vweird.f32 %v453
  %v547 = vadd.s32 %v543, 3
  %v548 = vand.u32 %v547, 3
  %vm549 = vcmp.lt.s32.totalorder %v548, 2
  %vm550 = vcmp.eq.s32.totalorder %v548, 0
  %v551 = vxor.u32 %v545, 2147483648
  %v552 = vsel %vm550, %v544, %v551
  %vm553 = vcmp.eq.s32.totalorder %v548, 2
  %v554 = vxor.u32 %v544, 2147483648
  %v555 = vsel %vm553, %v554, %v545
  %v556 = vsel %vm549, %v552, %v555
  %v557 = vsel %vm546, nan, %v556
  %558 = vst.msk [vmem:[%s2 + $0xf] sm:$0x3f] %vm129, %v557
  %v559 = vand.u32 2147483647, %v453
  %vm560 = vcmp.le.f32.partialorder %v559, 0.7853982
  %vm561 = vcmp.lt.s32.totalorder %v453, 0
  %v562 = vand.u32 %v453, 2139095040
  %v563 = vshrl.u32 %v562, 23
  %v564 = vsub.s32 %v563, 127
  %v565 = vand.u32 2147483647, %v453
  %v566 = vand.u32 %v565, 8388607
  %v567 = vor.u32 %v566, 8388608
  %v568 = vsub.s32 0, %v567
  %v569 = vadd.s32 %v564, 1
  %vm570 = vcmp.gt.s32.totalorder %v569, 0
  %v571 = vsel %vm570, %v569, 0
  %v572 = vshrl.u32 %v571, 5
  %v573 = vand.u32 %v571, 31
  %v574 = vsub.s32 32, %v573
  %v575 = vshrl.u32 683565275, %v574
  %v576 = vshll.u32 683565275, %v573
  %v577 = vshrl.u32 2475754826, %v574
  %v578 = vor.u32 %v576, %v577
  %v579 = vshll.u32 2475754826, %v573
  %v580 = vshrl.u32 2131351028, %v574
  %v581 = vor.u32 %v579, %v580
  %v582 = vshll.u32 2131351028, %v573
  %v583 = vshrl.u32 2102212464, %v574
  %v584 = vor.u32 %v582, %v583
  %v585 = vshll.u32 2102212464, %v573
  %v586 = vshrl.u32 920167782, %v574
  %v587 = vor.u32 %v585, %v586
  %v588 = vshll.u32 920167782, %v573
  %v589 = vshrl.u32 1326507024, %v574
  %v590 = vor.u32 %v588, %v589
  %vm591 = vcmp.lt.s32.totalorder %v572, 1
  %vm592 = vcmp.lt.s32.totalorder %v572, 2
  %vm593 = vcmp.lt.s32.totalorder %v572, 3
  %vm594 = vcmp.lt.s32.totalorder %v572, 4
  %v595 = vsel %vm591, %v575, %v578
  %v596 = vsel %vm594, %v584, 2102212464
  %v597 = vsel %vm593, %v581, %v596
  %v598 = vsel %vm592, %v595, %v597
  %v599 = vsel %vm591, %v578, %v581
  %v600 = vsel %vm594, %v587, 920167782
  %v601 = vsel %vm593, %v584, %v600
  %v602 = vsel %vm592, %v599, %v601
  %v603 = vsel %vm591, %v581, %v584
  %v604 = vsel %vm594, %v590, 1326507024
  %v605 = vsel %vm593, %v587, %v604
  %v606 = vsel %vm592, %v603, %v605
  %v607 = vshll.u32 %v567, 8
  %v608 = vmul.u32.u64.compose %v607, %v606
  %v609 = vextract.low.u32 %v608
  %v610 = vextract.high.u32 %v608
  %v611 = vmul.u32.u64.compose %v607, %v602
  %v612 = vextract.low.u32 %v611
  %v613 = vextract.high.u32 %v611
  %v614 = vmul.u32 %v607, %v598
  %v615 = vadd.s32 %v610, %v612
  %vm616 = vc.u32 %v610, %v612
  %v617 = vadd.s32 %v613, 1
  %v618 = vsel %vm616, %v617, %v613
  %v619 = vadd.s32 %v614, %v618
  %v620 = vadd.s32 %v619, 536870912
  %v621 = vshrl.u32 %v620, 30
  %v622 = vshll.u32 %v621, 30
  %v623 = vsub.s32 %v619, %v622
  %vm624 = vcmp.lt.s32.totalorder %v623, 0
  %v625 = vsub.s32 0, %v623
  %v626 = vsel %vm624, %v625, %v623
  %v627 = vclz %v626
  %v628 = vsub.s32 %v627, 2
  %vm629 = vcmp.gt.s32.totalorder 0, %v628
  %v630 = vsel %vm629, 0, %v628
  %v631 = vsub.s32 32, %v630
  %v632 = vshll.u32 %v623, %v630
  %v633 = vshrl.u32 %v615, %v631
  %v634 = vor.u32 %v632, %v633
  %v635 = vsub.s32 4294967266, %v630
  %v636 = vadd.s32 %v635, 127
  %v637 = vshll.u32 %v636, 23
  %v638 = vor.u32 4788187, %v637
  %v639 = vand.u32 2147483647, %v638
  %v641 = vcvt.s32.f32 %v634
  %v642 = vmul.f32 %v641, %v639
  %v643 = vxor.u32 %v642, 2147483648
  %v644 = vsel %vm561, %v643, %v642
  %v645 = vsub.s32 4, %v621
  %v646 = vsel %vm561, %v645, %v621
  %v647 = vsel %vm560, %v453, %v644
  %v648 = vsel %vm560, 0, %v646
  %v649 = vcosq.f32.pop %v647
  %v650 = vsinq.f32.pop %v647
  %vm651 = vweird.f32 %v453
  %v652 = vand.u32 %v648, 3
  %vm653 = vcmp.lt.s32.totalorder %v652, 2
  %vm654 = vcmp.eq.s32.totalorder %v652, 0
  %v655 = vxor.u32 %v650, 2147483648
  %v656 = vsel %vm654, %v649, %v655
  %vm657 = vcmp.eq.s32.totalorder %v652, 2
  %v658 = vxor.u32 %v649, 2147483648
  %v659 = vsel %vm657, %v658, %v650
  %v660 = vsel %vm653, %v656, %v659
  %v661 = vsel %vm651, nan, %v660
  %662 = vst.msk [vmem:[%s2 + $0x21] sm:$0x3f] %vm129, %v661
  // Predicated region
  $region10: #{tpu_custom_call.1} parent=0 // pred_check
    _
  $region11: #{tpu_custom_call.1} parent=0 // pred_check_branch
    %664 = sbr.rel (0) target = $region13
  $region12: #{tpu_custom_call.1} parent=0 // pred_region
    _
  $region13: #{tpu_custom_call.1} parent=0 // pred_fallthru
    _
  // Predicated region
  $region14: #{tpu_custom_call.1} parent=0 // pred_check
    _
  $region15: #{tpu_custom_call.1} parent=0 // pred_check_branch
    %666 = sbr.rel (0) target = $region17
  $region16: #{tpu_custom_call.1} parent=0 // pred_region
    _
  $region17: #{tpu_custom_call.1} parent=0 // pred_fallthru
    _

</llo_original>
